<compile_context>
chip_gen: v7x
topology: tpu7x:2x2x1
jax: 0.10.0
libtpu: 0.0.40
codegen_flags: <defaults>
</compile_context>

<pallas_src>
import numpy as np
import jax
import jax.numpy as jnp
from jax.experimental import pallas as pl
from jax.experimental.pallas import tpu as pltpu


def _make_kernel(ocm, output_act):
    def kernel(x_ref, wt_ref, b_ref, o_ref, acc_ref):
        k = pl.program_id(1)

        @pl.when(k == 0)
        def _():
            acc_ref[...] = jnp.zeros_like(acc_ref)

        # MXU hot path: the bit-plane sum is already folded into K, so one
        # matmul per (OUT-tile, K-tile) does all the work. Planes arrive as
        # int8 (exact 0/1) and are widened to f32; x is already scaled f32.
        acc_ref[...] += jnp.dot(
            x_ref[...],
            wt_ref[...].astype(jnp.float32),
            preferred_element_type=jnp.float32,
        )

        @pl.when(k == pl.num_programs(1) - 1)
        def _():
            y = acc_ref[...] + b_ref[...]
            if ocm:
                y = jax.nn.sigmoid(2.0 * y)          # EUP
            elif output_act == "tanh":
                y = jnp.tanh(y)                      # EUP
            # else: identity
            o_ref[...] = y.astype(o_ref.dtype)

    return kernel


def prepare_planes(w_twos, base, step_size):
    """One-time repack (per attack, NOT per forward call).

    w_twos: [OUT, IN, NBITS] (PyTorch layout) -> wt_flat [NBITS*IN, OUT] int8
    base:   [NBITS]                           -> base_scaled = base*step_size (f32)
    """
    OUT, IN, NBITS = w_twos.shape
    wt = jnp.transpose(w_twos, (2, 1, 0)).reshape(NBITS * IN, OUT)
    wt = wt.astype(jnp.int8)  # planes are exactly 0/1 -> int8 is lossless
    base_scaled = base.astype(jnp.float32) * jnp.float32(step_size)
    return wt, base_scaled


def _pick_tile(total, pref):
    """Largest multiple-of-128 divisor of `total` that is <= pref (or total)."""
    if total <= pref:
        return total
    t = (pref // 128) * 128
    while t >= 128:
        if total % t == 0:
            return t
        t -= 128
    return total


def auglag_forward(x, wt_flat, base_scaled, b, *, ocm=True, output_act=None,
                   tn=None, tk=None):
    """x: [B, IN]; wt_flat: [NBITS*IN, OUT] int8; base_scaled: [NBITS]; b: [OUT]."""
    B, IN = x.shape
    K, OUT = wt_flat.shape
    NBITS = base_scaled.shape[0]
    assert K == NBITS * IN

    # Tiny expansion (B*NBITS*IN elements, dwarfed by the plane operand):
    # folds base*step_size into the K dimension so the MXU does the bit sum.
    x_scaled = (x.astype(jnp.float32)[:, None, :]
                * base_scaled[None, :, None]).reshape(B, K)
    b2 = b.reshape(1, OUT).astype(jnp.float32)

    # Tile sizes: int8 planes are cheap in VMEM, so prefer large K tiles to
    # amortize per-step overhead; stays well under the scoped-VMEM default on
    # every generation (v5e/v6e/v7x).
    tn = tn or _pick_tile(OUT, 256)
    tk = tk or _pick_tile(K, 1024)
    assert OUT % tn == 0 and K % tk == 0

    kernel = _make_kernel(ocm, output_act)
    return pl.pallas_call(
        kernel,
        out_shape=jax.ShapeDtypeStruct((B, OUT), jnp.float32),
        grid_spec=pltpu.PrefetchScalarGridSpec(
            num_scalar_prefetch=0,
            grid=(OUT // tn, K // tk),
            in_specs=[
                pl.BlockSpec((B, tk), lambda j, k: (0, k)),    # scaled x (f32)
                pl.BlockSpec((tk, tn), lambda j, k: (k, j)),   # bit planes (int8)
                pl.BlockSpec((1, tn), lambda j, k: (0, j)),    # bias (f32)
            ],
            out_specs=pl.BlockSpec((B, tn), lambda j, k: (0, j)),
            scratch_shapes=[pltpu.VMEM((B, tn), jnp.float32)],  # f32 accumulator
        ),
        compiler_params=pltpu.CompilerParams(
            dimension_semantics=("parallel", "arbitrary"),
            vmem_limit_bytes=64 * 1024 * 1024,
        ),
    )(x_scaled, wt_flat, b2)


if __name__ == "__main__":
    # Small shapes consistent with the module (a quantized linear layer).
    B, IN, OUT, NBITS = 8, 128, 128, 8
    STEP_SIZE = 0.01
    OCM = True  # args.ocm branch: sigmoid(2*x)

    key = jax.random.PRNGKey(0)
    k_w, k_b, k_x = jax.random.split(key, 3)

    # Deterministic "checkpoint": quantized int weights in [-2^(n-1), 2^(n-1)).
    w_int = jax.random.randint(k_w, (OUT, IN), -2 ** (NBITS - 1), 2 ** (NBITS - 1),
                               dtype=jnp.int32)
    # reset_w_twos(): two's-complement bit decomposition, MSB first.
    u = jnp.mod(w_int, 2 ** NBITS)
    shifts = jnp.arange(NBITS - 1, -1, -1, dtype=jnp.int32)
    w_twos = ((u[:, :, None] >> shifts[None, None, :]) & 1).astype(jnp.float32)

    # base = [-2^(n-1), 2^(n-2), ..., 2, 1]
    base_np = np.array([2.0 ** i for i in range(NBITS - 1, -1, -1)], dtype=np.float32)
    base_np[0] = -base_np[0]
    base = jnp.asarray(base_np)

    b = jax.random.normal(k_b, (OUT,), dtype=jnp.float32)
    x = jax.random.normal(k_x, (B, IN), dtype=jnp.float32)

    # One-time repack into kernel layout (outside the attack's forward loop).
    wt_flat, base_scaled = prepare_planes(w_twos, base, STEP_SIZE)

    out = auglag_forward(x, wt_flat, base_scaled, b, ocm=OCM)
    out = jax.block_until_ready(out)

    # Pure-JAX reference of the PyTorch forward.
    w_ref = jnp.sum(w_twos * base[None, None, :], axis=2) * STEP_SIZE
    y_ref = x @ w_ref.T + b[None, :]
    y_ref = jax.nn.sigmoid(2.0 * y_ref) if OCM else y_ref

    np.testing.assert_allclose(np.asarray(out), np.asarray(y_ref),
                               rtol=5e-5, atol=5e-5)
    # TODO(synk): predict() path (softmax over relu(x @ C.T)) is a separate method,
    # not part of forward(); omitted.
    print("KERNEL_OK")
</pallas_src>

<mosaic_0001>
module attributes {stable_mosaic.version = 11 : i64} {
  func.func @kernel(%arg0: i32, %arg1: i32, %arg2: memref<8x1024xf32, #tpu.memory_space<vmem>>, %arg3: memref<1024x128xi8, #tpu.memory_space<vmem>>, %arg4: memref<1x128xf32, #tpu.memory_space<vmem>>, %arg5: memref<8x128xf32, #tpu.memory_space<vmem>>, %arg6: memref<8x128xf32, #tpu.memory_space<vmem>>) attributes {dimension_semantics = [#tpu.dimension_semantics<parallel>, #tpu.dimension_semantics<arbitrary>], iteration_bounds = array<i64: 1, 1>, scalar_prefetch = 0 : i64, scratch_operands = 1 : i64, tpu.core_type = #tpu.core_type<tc>, window_params = [{transform_indices = @transform_0, window_bounds = array<i64: 8, 1024>}, {transform_indices = @transform_1, window_bounds = array<i64: 1024, 128>}, {transform_indices = @transform_2, window_bounds = array<i64: 1, 128>}, {transform_indices = @transform_3, window_bounds = array<i64: 8, 128>}]} {
    %c0_i32 = arith.constant 0 : i32
    %0 = arith.cmpi eq, %arg1, %c0_i32 : i32
    %1 = arith.extui %0 : i1 to i32
    %c0_i32_0 = arith.constant 0 : i32
    %2 = arith.cmpi ne, %1, %c0_i32_0 : i32
    scf.if %2 {
      %cst_10 = arith.constant 0.000000e+00 : f32
      %13 = vector.broadcast %cst_10 : f32 to vector<8x128xf32>
      %c0_11 = arith.constant 0 : index
      %c0_12 = arith.constant 0 : index
      %14 = vector.load %arg6[%c0_11, %c0_12] : memref<8x128xf32, #tpu.memory_space<vmem>>, vector<8x128xf32>
      tpu.vector_store %arg6[%c0_11, %c0_12], %13 {strides = array<i32>} : memref<8x128xf32, #tpu.memory_space<vmem>>, vector<8x128xf32>,
    } else {
    }
    %c0 = arith.constant 0 : index
    %c0_1 = arith.constant 0 : index
    %3 = vector.load %arg6[%c0, %c0_1] : memref<8x128xf32, #tpu.memory_space<vmem>>, vector<8x128xf32>
    %c0_2 = arith.constant 0 : index
    %c0_3 = arith.constant 0 : index
    %4 = vector.load %arg2[%c0_2, %c0_3] : memref<8x1024xf32, #tpu.memory_space<vmem>>, vector<8x1024xf32>
    %c0_4 = arith.constant 0 : index
    %c0_5 = arith.constant 0 : index
    %5 = vector.load %arg3[%c0_4, %c0_5] : memref<1024x128xi8, #tpu.memory_space<vmem>>, vector<1024x128xi8>
    %6 = arith.sitofp %5 : vector<1024x128xi8> to vector<1024x128xf32>
    %cst = arith.constant dense<0.000000e+00> : vector<8x128xf32>
    %7 = tpu.matmul %4, %6, %cst {dimension_numbers = #tpu.dot_dimension_numbers<[1], [0], [0], [1], [0, 0, 1, 1], [], []>} : vector<8x1024xf32>, vector<1024x128xf32>, vector<8x128xf32> -> vector<8x128xf32>
    %8 = arith.addf %3, %7 : vector<8x128xf32>
    %c0_6 = arith.constant 0 : index
    %c0_7 = arith.constant 0 : index
    %9 = vector.load %arg6[%c0_6, %c0_7] : memref<8x128xf32, #tpu.memory_space<vmem>>, vector<8x128xf32>
    tpu.vector_store %arg6[%c0_6, %c0_7], %8 {strides = array<i32>} : memref<8x128xf32, #tpu.memory_space<vmem>>, vector<8x128xf32>,
    %c0_i32_8 = arith.constant 0 : i32
    %10 = arith.cmpi eq, %arg1, %c0_i32_8 : i32
    %11 = arith.extui %10 : i1 to i32
    %c0_i32_9 = arith.constant 0 : i32
    %12 = arith.cmpi ne, %11, %c0_i32_9 : i32
    scf.if %12 {
      %c0_10 = arith.constant 0 : index
      %c0_11 = arith.constant 0 : index
      %13 = vector.load %arg6[%c0_10, %c0_11] : memref<8x128xf32, #tpu.memory_space<vmem>>, vector<8x128xf32>
      %c0_12 = arith.constant 0 : index
      %c0_13 = arith.constant 0 : index
      %14 = vector.load %arg4[%c0_12, %c0_13] : memref<1x128xf32, #tpu.memory_space<vmem>>, vector<1x128xf32>
      %15 = vector.broadcast %14 : vector<1x128xf32> to vector<8x128xf32>
      %16 = arith.addf %13, %15 : vector<8x128xf32>
      %cst_14 = arith.constant 2.000000e+00 : f32
      %17 = vector.broadcast %cst_14 : f32 to vector<8x128xf32>
      %18 = arith.mulf %17, %16 : vector<8x128xf32>
      %19 = arith.negf %18 : vector<8x128xf32>
      %20 = math.exp %19 : vector<8x128xf32>
      %cst_15 = arith.constant 1.000000e+00 : f32
      %21 = vector.broadcast %cst_15 : f32 to vector<8x128xf32>
      %22 = arith.addf %21, %20 : vector<8x128xf32>
      %23 = arith.divf %21, %22 : vector<8x128xf32>
      %c0_16 = arith.constant 0 : index
      %c0_17 = arith.constant 0 : index
      %24 = vector.load %arg5[%c0_16, %c0_17] : memref<8x128xf32, #tpu.memory_space<vmem>>, vector<8x128xf32>
      tpu.vector_store %arg5[%c0_16, %c0_17], %23 {strides = array<i32>} : memref<8x128xf32, #tpu.memory_space<vmem>>, vector<8x128xf32>,
    } else {
    }
    return
  }
  func.func @transform_0(%arg0: i32, %arg1: i32) -> (i32, i32) {
    %c0_i32 = arith.constant 0 : i32
    %c0_i32_0 = arith.constant 0 : i32
    return %c0_i32, %arg1 : i32, i32
  }
  func.func @transform_1(%arg0: i32, %arg1: i32) -> (i32, i32) {
    %c0_i32 = arith.constant 0 : i32
    return %arg1, %arg0 : i32, i32
  }
  func.func @transform_2(%arg0: i32, %arg1: i32) -> (i32, i32) {
    %c0_i32 = arith.constant 0 : i32
    %c0_i32_0 = arith.constant 0 : i32
    return %c0_i32, %arg0 : i32, i32
  }
  func.func @transform_3(%arg0: i32, %arg1: i32) -> (i32, i32) {
    %c0_i32 = arith.constant 0 : i32
    %c0_i32_0 = arith.constant 0 : i32
    return %c0_i32, %arg0 : i32, i32
  }
}

</mosaic_0001>

<llo_original>
// kernel: tpu_custom_call.1
$region0: #{tpu_custom_call.1}
  #allocation0 [shape = 'u32[]', space=smem, size = 0x4, offset = 0x4, fixed_abs, tag = 'smem constant byte address 0x4 - core index']
  #allocation1 [shape = 'u32[144,128]{1,0:T(1,128)}', space=vmem, size = 0x12000, scoped, tag = 'internal scratch']
  #allocation2 [shape = 'f32[8,128]{1,0:T(8,128)}', space=vmem, size = 0x1000, scoped, tag = 'scratch operand']
  %s0 = inlined_call_operand.hbm [shape: f32[8,1024], index: 0, kind: input, shape index: {}]
  %s1 = inlined_call_operand.hbm [shape: s8[1024,128], index: 1, kind: input, shape index: {}]
  %s2 = inlined_call_operand.hbm [shape: f32[1,128], index: 2, kind: input, shape index: {}]
  %s3 = inlined_call_operand.hbm [shape: f32[8,128], index: 3, kind: output, shape index: {}]
  %s4 = sld [smem:[#allocation0]]
  $region42: #{tpu_custom_call.1} parent=0
    _
  %s6 = ssub.s32 1, %s4
  %s7 = scalar_select 0, %s6, %s4
  $region1: #{tpu_custom_call.1} parent=0
    #allocation3 [shape = 'u8[32768]{0}', space=vmem, size = 0x8000, scoped, tag = 'input window, operand 0, single buffered']
    #allocation4 [shape = 's32[1]{0}', space=sflag, size = 0x4, scoped, tag = 'scoped memory for tpu_custom_call.1']
    #allocation5 [shape = 's32[1]{0}', space=sflag, size = 0x4, scoped, tag = 'scoped memory for tpu_custom_call.1']
    #allocation6 [shape = 'u8[131072]{0}', space=vmem, size = 0x20000, scoped, tag = 'input window, operand 1, single buffered']
    #allocation7 [shape = 's32[1]{0}', space=sflag, size = 0x4, scoped, tag = 'scoped memory for tpu_custom_call.1']
    #allocation8 [shape = 'u8[512]{0}', space=vmem, size = 0x400, scoped, tag = 'input window, operand 2, single buffered']
    #allocation9 [shape = 'u8[4096]{0}', space=vmem, size = 0x1000, scoped, tag = 'output window, operand 0, single buffered']
    %8 = vsyncpa [#allocation4], 0
    %9 = vsyncpa [#allocation7], 0
    %10 = vsyncpa [#allocation5], 0
    // Predicated region
    $region2: #{tpu_custom_call.1} parent=1 // pred_check
      _
    $region3: #{tpu_custom_call.1} parent=1 // pred_check_branch
      %12 = sbr.rel (0) target = $region5
    $region4: #{tpu_custom_call.1} parent=1 // pred_region
      %s14 = ssub.s32 1024, 1024
      %15 = vsyncadd [#allocation4], %s14
      %s17 = sshll.u32 [#allocation3], 4
      %s18 = int_to_ptr.vmem [resolvable:$true] %s17
      %20 = dma.hbm_to_vmem [thread:$0]  %s0, 1024, %s18, [#allocation4]
    $region5: #{tpu_custom_call.1} parent=1 // pred_fallthru
      _
    // Predicated region
    $region6: #{tpu_custom_call.1} parent=1 // pred_check
      _
    $region7: #{tpu_custom_call.1} parent=1 // pred_check_branch
      %22 = sbr.rel (0) target = $region9
    $region8: #{tpu_custom_call.1} parent=1 // pred_region
      %s24 = ssub.s32 4096, 4096
      %25 = vsyncadd [#allocation7], %s24
      %s26 = sshll.u32 [#allocation6], 4
      %s27 = int_to_ptr.vmem [resolvable:$true] %s26
      %32 = dma.hbm_to_vmem [thread:$0]  %s1, 4096, %s27, [#allocation7], 128, 128, 8
    $region9: #{tpu_custom_call.1} parent=1 // pred_fallthru
      _
    // Predicated region
    $region10: #{tpu_custom_call.1} parent=1 // pred_check
      _
    $region11: #{tpu_custom_call.1} parent=1 // pred_check_branch
      %34 = sbr.rel (0) target = $region13
    $region12: #{tpu_custom_call.1} parent=1 // pred_region
      %s36 = ssub.s32 16, 16
      %37 = vsyncadd [#allocation7], %s36
      %s39 = sshll.u32 [#allocation8], 4
      %s40 = int_to_ptr.vmem [resolvable:$true] %s39
      %42 = dma.hbm_to_vmem [thread:$0]  %s2, 16, %s40, [#allocation7]
    $region13: #{tpu_custom_call.1} parent=1 // pred_fallthru
      _
    // Predicated region
    $region14: #{tpu_custom_call.1} parent=1 // pred_check
      _
    $region15: #{tpu_custom_call.1} parent=1 // pred_check_branch
      %44 = sbr.rel (0) target = $region17
    $region16: #{tpu_custom_call.1} parent=1 // pred_region
      %45 = dma.done [#allocation4], 1024
    $region17: #{tpu_custom_call.1} parent=1 // pred_fallthru
      _
    // Predicated region
    $region18: #{tpu_custom_call.1} parent=1 // pred_check
      _
    $region19: #{tpu_custom_call.1} parent=1 // pred_check_branch
      %47 = sbr.rel (0) target = $region21
    $region20: #{tpu_custom_call.1} parent=1 // pred_region
      %48 = dma.done [#allocation7], 4096
    $region21: #{tpu_custom_call.1} parent=1 // pred_fallthru
      _
    // Predicated region
    $region22: #{tpu_custom_call.1} parent=1 // pred_check
      _
    $region23: #{tpu_custom_call.1} parent=1 // pred_check_branch
      %50 = sbr.rel (0) target = $region25
    $region24: #{tpu_custom_call.1} parent=1 // pred_region
      %51 = dma.done [#allocation7], 16
    $region25: #{tpu_custom_call.1} parent=1 // pred_fallthru
      _
    %p52 = scmp.eq.s32.totalorder 0, 0
    // Predicated region
    $region26: #{tpu_custom_call.1} parent=1 // pred_check
      %p53 = pneg %p52
    $region27: #{tpu_custom_call.1} parent=1 // pred_check_branch
      %55 = sbr.rel (%p53) target = $region29
    $region28: #{tpu_custom_call.1} parent=1 // pred_region
      %56 = vst [vmem:[#allocation2] sm:$0xff] 0.0
    $region29: #{tpu_custom_call.1} parent=1 // pred_fallthru
      _
    %v57 = vld [vmem:[#allocation2] sm:$0xff]
    %v58 = vld [vmem:[#allocation3] sm:$0xff]
    %v59 = vld [vmem:[#allocation3 + $0x8] sm:$0xff]
    %v60 = vld [vmem:[#allocation3 + $0x10] sm:$0xff]
    %v61 = vld [vmem:[#allocation3 + $0x18] sm:$0xff]
    %v62 = vld [vmem:[#allocation3 + $0x20] sm:$0xff]
    %v63 = vld [vmem:[#allocation3 + $0x28] sm:$0xff]
    %v64 = vld [vmem:[#allocation3 + $0x30] sm:$0xff]
    %v65 = vld [vmem:[#allocation3 + $0x38] sm:$0xff]
    %v66 = vld [vmem:[#allocation6] sm:$0xff]
    %v67 = vld [vmem:[#allocation6 + $0x8] sm:$0xff]
    %v68 = vld [vmem:[#allocation6 + $0x10] sm:$0xff]
    %v69 = vld [vmem:[#allocation6 + $0x18] sm:$0xff]
    %v70 = vld [vmem:[#allocation6 + $0x20] sm:$0xff]
    %v71 = vld [vmem:[#allocation6 + $0x28] sm:$0xff]
    %v72 = vld [vmem:[#allocation6 + $0x30] sm:$0xff]
    %v73 = vld [vmem:[#allocation6 + $0x38] sm:$0xff]
    %v74 = vld [vmem:[#allocation6 + $0x40] sm:$0xff]
    %v75 = vld [vmem:[#allocation6 + $0x48] sm:$0xff]
    %v76 = vld [vmem:[#allocation6 + $0x50] sm:$0xff]
    %v77 = vld [vmem:[#allocation6 + $0x58] sm:$0xff]
    %v78 = vld [vmem:[#allocation6 + $0x60] sm:$0xff]
    %v79 = vld [vmem:[#allocation6 + $0x68] sm:$0xff]
    %v80 = vld [vmem:[#allocation6 + $0x70] sm:$0xff]
    %v81 = vld [vmem:[#allocation6 + $0x78] sm:$0xff]
    %v82 = vld [vmem:[#allocation6 + $0x80] sm:$0xff]
    %v83 = vld [vmem:[#allocation6 + $0x88] sm:$0xff]
    %v84 = vld [vmem:[#allocation6 + $0x90] sm:$0xff]
    %v85 = vld [vmem:[#allocation6 + $0x98] sm:$0xff]
    %v86 = vld [vmem:[#allocation6 + $0xa0] sm:$0xff]
    %v87 = vld [vmem:[#allocation6 + $0xa8] sm:$0xff]
    %v88 = vld [vmem:[#allocation6 + $0xb0] sm:$0xff]
    %v89 = vld [vmem:[#allocation6 + $0xb8] sm:$0xff]
    %v90 = vld [vmem:[#allocation6 + $0xc0] sm:$0xff]
    %v91 = vld [vmem:[#allocation6 + $0xc8] sm:$0xff]
    %v92 = vld [vmem:[#allocation6 + $0xd0] sm:$0xff]
    %v93 = vld [vmem:[#allocation6 + $0xd8] sm:$0xff]
    %v94 = vld [vmem:[#allocation6 + $0xe0] sm:$0xff]
    %v95 = vld [vmem:[#allocation6 + $0xe8] sm:$0xff]
    %v96 = vld [vmem:[#allocation6 + $0xf0] sm:$0xff]
    %v97 = vld [vmem:[#allocation6 + $0xf8] sm:$0xff]
    %v98 = vunpack.c.0.s8 %v66
    %v99 = vunpack.c.1.s8 %v66
    %v100 = vunpack.c.2.s8 %v66
    %v101 = vunpack.c.3.s8 %v66
    %v102 = vunpack.c.0.s8 %v67
    %v103 = vunpack.c.1.s8 %v67
    %v104 = vunpack.c.2.s8 %v67
    %v105 = vunpack.c.3.s8 %v67
    %v106 = vunpack.c.0.s8 %v68
    %v107 = vunpack.c.1.s8 %v68
    %v108 = vunpack.c.2.s8 %v68
    %v109 = vunpack.c.3.s8 %v68
    %v110 = vunpack.c.0.s8 %v69
    %v111 = vunpack.c.1.s8 %v69
    %v112 = vunpack.c.2.s8 %v69
    %v113 = vunpack.c.3.s8 %v69
    %v114 = vunpack.c.0.s8 %v70
    %v115 = vunpack.c.1.s8 %v70
    %v116 = vunpack.c.2.s8 %v70
    %v117 = vunpack.c.3.s8 %v70
    %v118 = vunpack.c.0.s8 %v71
    %v119 = vunpack.c.1.s8 %v71
    %v120 = vunpack.c.2.s8 %v71
    %v121 = vunpack.c.3.s8 %v71
    %v122 = vunpack.c.0.s8 %v72
    %v123 = vunpack.c.1.s8 %v72
    %v124 = vunpack.c.2.s8 %v72
    %v125 = vunpack.c.3.s8 %v72
    %v126 = vunpack.c.0.s8 %v73
    %v127 = vunpack.c.1.s8 %v73
    %v128 = vunpack.c.2.s8 %v73
    %v129 = vunpack.c.3.s8 %v73
    %v130 = vunpack.c.0.s8 %v74
    %v131 = vunpack.c.1.s8 %v74
    %v132 = vunpack.c.2.s8 %v74
    %v133 = vunpack.c.3.s8 %v74
    %v134 = vunpack.c.0.s8 %v75
    %v135 = vunpack.c.1.s8 %v75
    %v136 = vunpack.c.2.s8 %v75
    %v137 = vunpack.c.3.s8 %v75
    %v138 = vunpack.c.0.s8 %v76
    %v139 = vunpack.c.1.s8 %v76
    %v140 = vunpack.c.2.s8 %v76
    %v141 = vunpack.c.3.s8 %v76
    %v142 = vunpack.c.0.s8 %v77
    %v143 = vunpack.c.1.s8 %v77
    %v144 = vunpack.c.2.s8 %v77
    %v145 = vunpack.c.3.s8 %v77
    %v146 = vunpack.c.0.s8 %v78
    %v147 = vunpack.c.1.s8 %v78
    %v148 = vunpack.c.2.s8 %v78
    %v149 = vunpack.c.3.s8 %v78
    %v150 = vunpack.c.0.s8 %v79
    %v151 = vunpack.c.1.s8 %v79
    %v152 = vunpack.c.2.s8 %v79
    %v153 = vunpack.c.3.s8 %v79
    %v154 = vunpack.c.0.s8 %v80
    %v155 = vunpack.c.1.s8 %v80
    %v156 = vunpack.c.2.s8 %v80
    %v157 = vunpack.c.3.s8 %v80
    %v158 = vunpack.c.0.s8 %v81
    %v159 = vunpack.c.1.s8 %v81
    %v160 = vunpack.c.2.s8 %v81
    %v161 = vunpack.c.3.s8 %v81
    %v162 = vunpack.c.0.s8 %v82
    %v163 = vunpack.c.1.s8 %v82
    %v164 = vunpack.c.2.s8 %v82
    %v165 = vunpack.c.3.s8 %v82
    %v166 = vunpack.c.0.s8 %v83
    %v167 = vunpack.c.1.s8 %v83
    %v168 = vunpack.c.2.s8 %v83
    %v169 = vunpack.c.3.s8 %v83
    %v170 = vunpack.c.0.s8 %v84
    %v171 = vunpack.c.1.s8 %v84
    %v172 = vunpack.c.2.s8 %v84
    %v173 = vunpack.c.3.s8 %v84
    %v174 = vunpack.c.0.s8 %v85
    %v175 = vunpack.c.1.s8 %v85
    %v176 = vunpack.c.2.s8 %v85
    %v177 = vunpack.c.3.s8 %v85
    %v178 = vunpack.c.0.s8 %v86
    %v179 = vunpack.c.1.s8 %v86
    %v180 = vunpack.c.2.s8 %v86
    %v181 = vunpack.c.3.s8 %v86
    %v182 = vunpack.c.0.s8 %v87
    %v183 = vunpack.c.1.s8 %v87
    %v184 = vunpack.c.2.s8 %v87
    %v185 = vunpack.c.3.s8 %v87
    %v186 = vunpack.c.0.s8 %v88
    %v187 = vunpack.c.1.s8 %v88
    %v188 = vunpack.c.2.s8 %v88
    %v189 = vunpack.c.3.s8 %v88
    %v190 = vunpack.c.0.s8 %v89
    %v191 = vunpack.c.1.s8 %v89
    %v192 = vunpack.c.2.s8 %v89
    %v193 = vunpack.c.3.s8 %v89
    %v194 = vunpack.c.0.s8 %v90
    %v195 = vunpack.c.1.s8 %v90
    %v196 = vunpack.c.2.s8 %v90
    %v197 = vunpack.c.3.s8 %v90
    %v198 = vunpack.c.0.s8 %v91
    %v199 = vunpack.c.1.s8 %v91
    %v200 = vunpack.c.2.s8 %v91
    %v201 = vunpack.c.3.s8 %v91
    %v202 = vunpack.c.0.s8 %v92
    %v203 = vunpack.c.1.s8 %v92
    %v204 = vunpack.c.2.s8 %v92
    %v205 = vunpack.c.3.s8 %v92
    %v206 = vunpack.c.0.s8 %v93
    %v207 = vunpack.c.1.s8 %v93
    %v208 = vunpack.c.2.s8 %v93
    %v209 = vunpack.c.3.s8 %v93
    %v210 = vunpack.c.0.s8 %v94
    %v211 = vunpack.c.1.s8 %v94
    %v212 = vunpack.c.2.s8 %v94
    %v213 = vunpack.c.3.s8 %v94
    %v214 = vunpack.c.0.s8 %v95
    %v215 = vunpack.c.1.s8 %v95
    %v216 = vunpack.c.2.s8 %v95
    %v217 = vunpack.c.3.s8 %v95
    %v218 = vunpack.c.0.s8 %v96
    %v219 = vunpack.c.1.s8 %v96
    %v220 = vunpack.c.2.s8 %v96
    %v221 = vunpack.c.3.s8 %v96
    %v222 = vunpack.c.0.s8 %v97
    %v223 = vunpack.c.1.s8 %v97
    %v224 = vunpack.c.2.s8 %v97
    %v225 = vunpack.c.3.s8 %v97
    %v226 = vcvt.s32.f32 %v98
    %v227 = vcvt.s32.f32 %v99
    %v228 = vcvt.s32.f32 %v100
    %v229 = vcvt.s32.f32 %v101
    %v230 = vcvt.s32.f32 %v102
    %v231 = vcvt.s32.f32 %v103
    %v232 = vcvt.s32.f32 %v104
    %v233 = vcvt.s32.f32 %v105
    %v234 = vcvt.s32.f32 %v106
    %v235 = vcvt.s32.f32 %v107
    %v236 = vcvt.s32.f32 %v108
    %v237 = vcvt.s32.f32 %v109
    %v238 = vcvt.s32.f32 %v110
    %v239 = vcvt.s32.f32 %v111
    %v240 = vcvt.s32.f32 %v112
    %v241 = vcvt.s32.f32 %v113
    %v242 = vcvt.s32.f32 %v114
    %v243 = vcvt.s32.f32 %v115
    %v244 = vcvt.s32.f32 %v116
    %v245 = vcvt.s32.f32 %v117
    %v246 = vcvt.s32.f32 %v118
    %v247 = vcvt.s32.f32 %v119
    %v248 = vcvt.s32.f32 %v120
    %v249 = vcvt.s32.f32 %v121
    %v250 = vcvt.s32.f32 %v122
    %v251 = vcvt.s32.f32 %v123
    %v252 = vcvt.s32.f32 %v124
    %v253 = vcvt.s32.f32 %v125
    %v254 = vcvt.s32.f32 %v126
    %v255 = vcvt.s32.f32 %v127
    %v256 = vcvt.s32.f32 %v128
    %v257 = vcvt.s32.f32 %v129
    %v258 = vcvt.s32.f32 %v130
    %v259 = vcvt.s32.f32 %v131
    %v260 = vcvt.s32.f32 %v132
    %v261 = vcvt.s32.f32 %v133
    %v262 = vcvt.s32.f32 %v134
    %v263 = vcvt.s32.f32 %v135
    %v264 = vcvt.s32.f32 %v136
    %v265 = vcvt.s32.f32 %v137
    %v266 = vcvt.s32.f32 %v138
    %v267 = vcvt.s32.f32 %v139
    %v268 = vcvt.s32.f32 %v140
    %v269 = vcvt.s32.f32 %v141
    %v270 = vcvt.s32.f32 %v142
    %v271 = vcvt.s32.f32 %v143
    %v272 = vcvt.s32.f32 %v144
    %v273 = vcvt.s32.f32 %v145
    %v274 = vcvt.s32.f32 %v146
    %v275 = vcvt.s32.f32 %v147
    %v276 = vcvt.s32.f32 %v148
    %v277 = vcvt.s32.f32 %v149
    %v278 = vcvt.s32.f32 %v150
    %v279 = vcvt.s32.f32 %v151
    %v280 = vcvt.s32.f32 %v152
    %v281 = vcvt.s32.f32 %v153
    %v282 = vcvt.s32.f32 %v154
    %v283 = vcvt.s32.f32 %v155
    %v284 = vcvt.s32.f32 %v156
    %v285 = vcvt.s32.f32 %v157
    %v286 = vcvt.s32.f32 %v158
    %v287 = vcvt.s32.f32 %v159
    %v288 = vcvt.s32.f32 %v160
    %v289 = vcvt.s32.f32 %v161
    %v290 = vcvt.s32.f32 %v162
    %v291 = vcvt.s32.f32 %v163
    %v292 = vcvt.s32.f32 %v164
    %v293 = vcvt.s32.f32 %v165
    %v294 = vcvt.s32.f32 %v166
    %v295 = vcvt.s32.f32 %v167
    %v296 = vcvt.s32.f32 %v168
    %v297 = vcvt.s32.f32 %v169
    %v298 = vcvt.s32.f32 %v170
    %v299 = vcvt.s32.f32 %v171
    %v300 = vcvt.s32.f32 %v172
    %v301 = vcvt.s32.f32 %v173
    %v302 = vcvt.s32.f32 %v174
    %v303 = vcvt.s32.f32 %v175
    %v304 = vcvt.s32.f32 %v176
    %v305 = vcvt.s32.f32 %v177
    %v306 = vcvt.s32.f32 %v178
    %v307 = vcvt.s32.f32 %v179
    %v308 = vcvt.s32.f32 %v180
    %v309 = vcvt.s32.f32 %v181
    %v310 = vcvt.s32.f32 %v182
    %v311 = vcvt.s32.f32 %v183
    %v312 = vcvt.s32.f32 %v184
    %v313 = vcvt.s32.f32 %v185
    %v314 = vcvt.s32.f32 %v186
    %v315 = vcvt.s32.f32 %v187
    %v316 = vcvt.s32.f32 %v188
    %v317 = vcvt.s32.f32 %v189
    %v318 = vcvt.s32.f32 %v190
    %v319 = vcvt.s32.f32 %v191
    %v320 = vcvt.s32.f32 %v192
    %v321 = vcvt.s32.f32 %v193
    %v322 = vcvt.s32.f32 %v194
    %v323 = vcvt.s32.f32 %v195
    %v324 = vcvt.s32.f32 %v196
    %v325 = vcvt.s32.f32 %v197
    %v326 = vcvt.s32.f32 %v198
    %v327 = vcvt.s32.f32 %v199
    %v328 = vcvt.s32.f32 %v200
    %v329 = vcvt.s32.f32 %v201
    %v330 = vcvt.s32.f32 %v202
    %v331 = vcvt.s32.f32 %v203
    %v332 = vcvt.s32.f32 %v204
    %v333 = vcvt.s32.f32 %v205
    %v334 = vcvt.s32.f32 %v206
    %v335 = vcvt.s32.f32 %v207
    %v336 = vcvt.s32.f32 %v208
    %v337 = vcvt.s32.f32 %v209
    %v338 = vcvt.s32.f32 %v210
    %v339 = vcvt.s32.f32 %v211
    %v340 = vcvt.s32.f32 %v212
    %v341 = vcvt.s32.f32 %v213
    %v342 = vcvt.s32.f32 %v214
    %v343 = vcvt.s32.f32 %v215
    %v344 = vcvt.s32.f32 %v216
    %v345 = vcvt.s32.f32 %v217
    %v346 = vcvt.s32.f32 %v218
    %v347 = vcvt.s32.f32 %v219
    %v348 = vcvt.s32.f32 %v220
    %v349 = vcvt.s32.f32 %v221
    %v350 = vcvt.s32.f32 %v222
    %v351 = vcvt.s32.f32 %v223
    %v352 = vcvt.s32.f32 %v224
    %v353 = vcvt.s32.f32 %v225
    %354 = vmatprep.subr.mxu0 0.0
    %355 = vmatpush1.msra.mxu0 %v226
    %356 = vmatprep.subr.mxu0 0.0
    %357 = vmatpush1.msra.mxu0 %v227
    %358 = vmatprep.subr.mxu0 0.0
    %359 = vmatpush1.msra.mxu0 %v228
    %360 = vmatprep.subr.mxu0 0.0
    %361 = vmatpush1.msra.mxu0 %v229
    %362 = vmatprep.subr.mxu0 0.0
    %363 = vmatpush1.msra.mxu0 %v230
    %364 = vmatprep.subr.mxu0 0.0
    %365 = vmatpush1.msra.mxu0 %v231
    %366 = vmatprep.subr.mxu0 0.0
    %367 = vmatpush1.msra.mxu0 %v232
    %368 = vmatprep.subr.mxu0 0.0
    %369 = vmatpush1.msra.mxu0 %v233
    %370 = vmatprep.subr.mxu0 0.0
    %371 = vmatpush1.msra.mxu0 %v234
    %372 = vmatprep.subr.mxu0 0.0
    %373 = vmatpush1.msra.mxu0 %v235
    %374 = vmatprep.subr.mxu0 0.0
    %375 = vmatpush1.msra.mxu0 %v236
    %376 = vmatprep.subr.mxu0 0.0
    %377 = vmatpush1.msra.mxu0 %v237
    %378 = vmatprep.subr.mxu0 0.0
    %379 = vmatpush1.msra.mxu0 %v238
    %380 = vmatprep.subr.mxu0 0.0
    %381 = vmatpush1.msra.mxu0 %v239
    %382 = vmatprep.subr.mxu0 0.0
    %383 = vmatpush1.msra.mxu0 %v240
    %384 = vmatprep.subr.mxu0 0.0
    %385 = vmatpush1.msra.mxu0 %v241
    %386 = vmatprep.subr.mxu0 0.0
    %387 = vmatpush1.msra.mxu0 %v242
    %388 = vmatprep.subr.mxu0 0.0
    %389 = vmatpush1.msra.mxu0 %v243
    %390 = vmatprep.subr.mxu0 0.0
    %391 = vmatpush1.msra.mxu0 %v244
    %392 = vmatprep.subr.mxu0 0.0
    %393 = vmatpush1.msra.mxu0 %v245
    %394 = vmatprep.subr.mxu0 0.0
    %395 = vmatpush1.msra.mxu0 %v246
    %396 = vmatprep.subr.mxu0 0.0
    %397 = vmatpush1.msra.mxu0 %v247
    %398 = vmatprep.subr.mxu0 0.0
    %399 = vmatpush1.msra.mxu0 %v248
    %400 = vmatprep.subr.mxu0 0.0
    %401 = vmatpush1.msra.mxu0 %v249
    %402 = vmatprep.subr.mxu0 0.0
    %403 = vmatpush1.msra.mxu0 %v250
    %404 = vmatprep.subr.mxu0 0.0
    %405 = vmatpush1.msra.mxu0 %v251
    %406 = vmatprep.subr.mxu0 0.0
    %407 = vmatpush1.msra.mxu0 %v252
    %408 = vmatprep.subr.mxu0 0.0
    %409 = vmatpush1.msra.mxu0 %v253
    %410 = vmatprep.subr.mxu0 0.0
    %411 = vmatpush1.msra.mxu0 %v254
    %412 = vmatprep.subr.mxu0 0.0
    %413 = vmatpush1.msra.mxu0 %v255
    %414 = vmatprep.subr.mxu0 0.0
    %415 = vmatpush1.msra.mxu0 %v256
    %416 = vmatprep.subr.mxu0 0.0
    %417 = vmatpush1.msra.mxu0 %v257
    %418 = vmatprep.mubr.f32.mxu0 %v59
    %419 = vmatmul.mubr.f32.gmra.mrb[0].mxu0 %v58
    %v420 = vpop.f32.mrb[0].mxu0
    %v421 = vadd.f32 0.0, %v420
    %v422 = vpop.f32.mrb[0].mxu0
    %423 = vdwg.mxu0
    %424 = vmatprep.subr.mxu0 0.0
    %425 = vmatpush1.msra.mxu0 %v258
    %426 = vmatprep.subr.mxu0 0.0
    %427 = vmatpush1.msra.mxu0 %v259
    %428 = vmatprep.subr.mxu0 0.0
    %429 = vmatpush1.msra.mxu0 %v260
    %430 = vmatprep.subr.mxu0 0.0
    %431 = vmatpush1.msra.mxu0 %v261
    %432 = vmatprep.subr.mxu0 0.0
    %433 = vmatpush1.msra.mxu0 %v262
    %434 = vmatprep.subr.mxu0 0.0
    %435 = vmatpush1.msra.mxu0 %v263
    %436 = vmatprep.subr.mxu0 0.0
    %437 = vmatpush1.msra.mxu0 %v264
    %438 = vmatprep.subr.mxu0 0.0
    %439 = vmatpush1.msra.mxu0 %v265
    %440 = vmatprep.subr.mxu0 0.0
    %441 = vmatpush1.msra.mxu0 %v266
    %442 = vmatprep.subr.mxu0 0.0
    %443 = vmatpush1.msra.mxu0 %v267
    %444 = vmatprep.subr.mxu0 0.0
    %445 = vmatpush1.msra.mxu0 %v268
    %446 = vmatprep.subr.mxu0 0.0
    %447 = vmatpush1.msra.mxu0 %v269
    %448 = vmatprep.subr.mxu0 0.0
    %449 = vmatpush1.msra.mxu0 %v270
    %450 = vmatprep.subr.mxu0 0.0
    %451 = vmatpush1.msra.mxu0 %v271
    %452 = vmatprep.subr.mxu0 0.0
    %453 = vmatpush1.msra.mxu0 %v272
    %454 = vmatprep.subr.mxu0 0.0
    %455 = vmatpush1.msra.mxu0 %v273
    %456 = vmatprep.subr.mxu0 0.0
    %457 = vmatpush1.msra.mxu0 %v274
    %458 = vmatprep.subr.mxu0 0.0
    %459 = vmatpush1.msra.mxu0 %v275
    %460 = vmatprep.subr.mxu0 0.0
    %461 = vmatpush1.msra.mxu0 %v276
    %462 = vmatprep.subr.mxu0 0.0
    %463 = vmatpush1.msra.mxu0 %v277
    %464 = vmatprep.subr.mxu0 0.0
    %465 = vmatpush1.msra.mxu0 %v278
    %466 = vmatprep.subr.mxu0 0.0
    %467 = vmatpush1.msra.mxu0 %v279
    %468 = vmatprep.subr.mxu0 0.0
    %469 = vmatpush1.msra.mxu0 %v280
    %470 = vmatprep.subr.mxu0 0.0
    %471 = vmatpush1.msra.mxu0 %v281
    %472 = vmatprep.subr.mxu0 0.0
    %473 = vmatpush1.msra.mxu0 %v282
    %474 = vmatprep.subr.mxu0 0.0
    %475 = vmatpush1.msra.mxu0 %v283
    %476 = vmatprep.subr.mxu0 0.0
    %477 = vmatpush1.msra.mxu0 %v284
    %478 = vmatprep.subr.mxu0 0.0
    %479 = vmatpush1.msra.mxu0 %v285
    %480 = vmatprep.subr.mxu0 0.0
    %481 = vmatpush1.msra.mxu0 %v286
    %482 = vmatprep.subr.mxu0 0.0
    %483 = vmatpush1.msra.mxu0 %v287
    %484 = vmatprep.subr.mxu0 0.0
    %485 = vmatpush1.msra.mxu0 %v288
    %486 = vmatprep.subr.mxu0 0.0
    %487 = vmatpush1.msra.mxu0 %v289
    %488 = vmatprep.mubr.f32.mxu0 %v61
    %489 = vmatmul.mubr.f32.gmra.mrb[0].mxu0 %v60
    %v490 = vpop.f32.mrb[0].mxu0
    %v491 = vadd.f32 %v421, %v490
    %v492 = vpop.f32.mrb[0].mxu0
    %493 = vdwg.mxu0
    %494 = vmatprep.subr.mxu0 0.0
    %495 = vmatpush1.msra.mxu0 %v290
    %496 = vmatprep.subr.mxu0 0.0
    %497 = vmatpush1.msra.mxu0 %v291
    %498 = vmatprep.subr.mxu0 0.0
    %499 = vmatpush1.msra.mxu0 %v292
    %500 = vmatprep.subr.mxu0 0.0
    %501 = vmatpush1.msra.mxu0 %v293
    %502 = vmatprep.subr.mxu0 0.0
    %503 = vmatpush1.msra.mxu0 %v294
    %504 = vmatprep.subr.mxu0 0.0
    %505 = vmatpush1.msra.mxu0 %v295
    %506 = vmatprep.subr.mxu0 0.0
    %507 = vmatpush1.msra.mxu0 %v296
    %508 = vmatprep.subr.mxu0 0.0
    %509 = vmatpush1.msra.mxu0 %v297
    %510 = vmatprep.subr.mxu0 0.0
    %511 = vmatpush1.msra.mxu0 %v298
    %512 = vmatprep.subr.mxu0 0.0
    %513 = vmatpush1.msra.mxu0 %v299
    %514 = vmatprep.subr.mxu0 0.0
    %515 = vmatpush1.msra.mxu0 %v300
    %516 = vmatprep.subr.mxu0 0.0
    %517 = vmatpush1.msra.mxu0 %v301
    %518 = vmatprep.subr.mxu0 0.0
    %519 = vmatpush1.msra.mxu0 %v302
    %520 = vmatprep.subr.mxu0 0.0
    %521 = vmatpush1.msra.mxu0 %v303
    %522 = vmatprep.subr.mxu0 0.0
    %523 = vmatpush1.msra.mxu0 %v304
    %524 = vmatprep.subr.mxu0 0.0
    %525 = vmatpush1.msra.mxu0 %v305
    %526 = vmatprep.subr.mxu0 0.0
    %527 = vmatpush1.msra.mxu0 %v306
    %528 = vmatprep.subr.mxu0 0.0
    %529 = vmatpush1.msra.mxu0 %v307
    %530 = vmatprep.subr.mxu0 0.0
    %531 = vmatpush1.msra.mxu0 %v308
    %532 = vmatprep.subr.mxu0 0.0
    %533 = vmatpush1.msra.mxu0 %v309
    %534 = vmatprep.subr.mxu0 0.0
    %535 = vmatpush1.msra.mxu0 %v310
    %536 = vmatprep.subr.mxu0 0.0
    %537 = vmatpush1.msra.mxu0 %v311
    %538 = vmatprep.subr.mxu0 0.0
    %539 = vmatpush1.msra.mxu0 %v312
    %540 = vmatprep.subr.mxu0 0.0
    %541 = vmatpush1.msra.mxu0 %v313
    %542 = vmatprep.subr.mxu0 0.0
    %543 = vmatpush1.msra.mxu0 %v314
    %544 = vmatprep.subr.mxu0 0.0
    %545 = vmatpush1.msra.mxu0 %v315
    %546 = vmatprep.subr.mxu0 0.0
    %547 = vmatpush1.msra.mxu0 %v316
    %548 = vmatprep.subr.mxu0 0.0
    %549 = vmatpush1.msra.mxu0 %v317
    %550 = vmatprep.subr.mxu0 0.0
    %551 = vmatpush1.msra.mxu0 %v318
    %552 = vmatprep.subr.mxu0 0.0
    %553 = vmatpush1.msra.mxu0 %v319
    %554 = vmatprep.subr.mxu0 0.0
    %555 = vmatpush1.msra.mxu0 %v320
    %556 = vmatprep.subr.mxu0 0.0
    %557 = vmatpush1.msra.mxu0 %v321
    %558 = vmatprep.mubr.f32.mxu0 %v63
    %559 = vmatmul.mubr.f32.gmra.mrb[0].mxu0 %v62
    %v560 = vpop.f32.mrb[0].mxu0
    %v561 = vadd.f32 %v491, %v560
    %v562 = vpop.f32.mrb[0].mxu0
    %563 = vdwg.mxu0
    %564 = vmatprep.subr.mxu0 0.0
    %565 = vmatpush1.msra.mxu0 %v322
    %566 = vmatprep.subr.mxu0 0.0
    %567 = vmatpush1.msra.mxu0 %v323
    %568 = vmatprep.subr.mxu0 0.0
    %569 = vmatpush1.msra.mxu0 %v324
    %570 = vmatprep.subr.mxu0 0.0
    %571 = vmatpush1.msra.mxu0 %v325
    %572 = vmatprep.subr.mxu0 0.0
    %573 = vmatpush1.msra.mxu0 %v326
    %574 = vmatprep.subr.mxu0 0.0
    %575 = vmatpush1.msra.mxu0 %v327
    %576 = vmatprep.subr.mxu0 0.0
    %577 = vmatpush1.msra.mxu0 %v328
    %578 = vmatprep.subr.mxu0 0.0
    %579 = vmatpush1.msra.mxu0 %v329
    %580 = vmatprep.subr.mxu0 0.0
    %581 = vmatpush1.msra.mxu0 %v330
    %582 = vmatprep.subr.mxu0 0.0
    %583 = vmatpush1.msra.mxu0 %v331
    %584 = vmatprep.subr.mxu0 0.0
    %585 = vmatpush1.msra.mxu0 %v332
    %586 = vmatprep.subr.mxu0 0.0
    %587 = vmatpush1.msra.mxu0 %v333
    %588 = vmatprep.subr.mxu0 0.0
    %589 = vmatpush1.msra.mxu0 %v334
    %590 = vmatprep.subr.mxu0 0.0
    %591 = vmatpush1.msra.mxu0 %v335
    %592 = vmatprep.subr.mxu0 0.0
    %593 = vmatpush1.msra.mxu0 %v336
    %594 = vmatprep.subr.mxu0 0.0
    %595 = vmatpush1.msra.mxu0 %v337
    %596 = vmatprep.subr.mxu0 0.0
    %597 = vmatpush1.msra.mxu0 %v338
    %598 = vmatprep.subr.mxu0 0.0
    %599 = vmatpush1.msra.mxu0 %v339
    %600 = vmatprep.subr.mxu0 0.0
    %601 = vmatpush1.msra.mxu0 %v340
    %602 = vmatprep.subr.mxu0 0.0
    %603 = vmatpush1.msra.mxu0 %v341
    %604 = vmatprep.subr.mxu0 0.0
    %605 = vmatpush1.msra.mxu0 %v342
    %606 = vmatprep.subr.mxu0 0.0
    %607 = vmatpush1.msra.mxu0 %v343
    %608 = vmatprep.subr.mxu0 0.0
    %609 = vmatpush1.msra.mxu0 %v344
    %610 = vmatprep.subr.mxu0 0.0
    %611 = vmatpush1.msra.mxu0 %v345
    %612 = vmatprep.subr.mxu0 0.0
    %613 = vmatpush1.msra.mxu0 %v346
    %614 = vmatprep.subr.mxu0 0.0
    %615 = vmatpush1.msra.mxu0 %v347
    %616 = vmatprep.subr.mxu0 0.0
    %617 = vmatpush1.msra.mxu0 %v348
    %618 = vmatprep.subr.mxu0 0.0
    %619 = vmatpush1.msra.mxu0 %v349
    %620 = vmatprep.subr.mxu0 0.0
    %621 = vmatpush1.msra.mxu0 %v350
    %622 = vmatprep.subr.mxu0 0.0
    %623 = vmatpush1.msra.mxu0 %v351
    %624 = vmatprep.subr.mxu0 0.0
    %625 = vmatpush1.msra.mxu0 %v352
    %626 = vmatprep.subr.mxu0 0.0
    %627 = vmatpush1.msra.mxu0 %v353
    %628 = vmatprep.mubr.f32.mxu0 %v65
    %629 = vmatmul.mubr.f32.gmra.mrb[0].mxu0 %v64
    %v630 = vpop.f32.mrb[0].mxu0
    %v631 = vadd.f32 %v561, %v630
    %v632 = vpop.f32.mrb[0].mxu0
    %633 = vdwg.mxu0
    %v634 = vadd.f32 %v57, %v631
    %635 = vst [vmem:[#allocation2] sm:$0xff] %v634
    // Predicated region
    $region30: #{tpu_custom_call.1} parent=1 // pred_check
      %p636 = pneg %p52
    $region31: #{tpu_custom_call.1} parent=1 // pred_check_branch
      %638 = sbr.rel (%p636) target = $region33
    $region32: #{tpu_custom_call.1} parent=1 // pred_region
      %v639 = vld [vmem:[#allocation2] sm:$0xff]
      %v640 = vld [vmem:[#allocation8] sm:$0x1]
      %v642 = vlaneseq
      %v643 = vshrl.u32 %v642, 7
      %v644 = vsub.s32 0, %v643
      %v645 = vrot.slane %v640, %v644
      %v647 = vadd.f32 %v639, %v645
      %v648 = vmul.f32 %v647, 2.0
      %v649 = vxor.u32 %v648, 2147483648
      %v650 = vmul.f32 %v649, 1.442695
      %v651 = vpow.pop %v650
      %v652 = vadd.f32 %v651, 1.0
      %v653 = vrcp.pop %v652
      %v654 = vmul.f32 1.0, %v653
      %655 = vst [vmem:[#allocation9] sm:$0xff] %v654
    $region33: #{tpu_custom_call.1} parent=1 // pred_fallthru
      _
    // Predicated region
    $region34: #{tpu_custom_call.1} parent=1 // pred_check
      _
    $region35: #{tpu_custom_call.1} parent=1 // pred_check_branch
      %657 = sbr.rel (0) target = $region37
    $region36: #{tpu_custom_call.1} parent=1 // pred_region
      %s659 = ssub.s32 128, 128
      %660 = vsyncadd [#allocation5], %s659
      %s662 = sshll.u32 [#allocation9], 4
      %s663 = int_to_ptr.vmem [resolvable:$true] %s662
      %665 = dma.vmem_to_hbm [thread:$0]  %s663, 128, %s3, [#allocation5]
    $region37: #{tpu_custom_call.1} parent=1 // pred_fallthru
      _
    // Predicated region
    $region38: #{tpu_custom_call.1} parent=1 // pred_check
      _
    $region39: #{tpu_custom_call.1} parent=1 // pred_check_branch
      %667 = sbr.rel (0) target = $region41
    $region40: #{tpu_custom_call.1} parent=1 // pred_region
      %668 = dma.done [#allocation5], 128
    $region41: #{tpu_custom_call.1} parent=1 // pred_fallthru
      _
    %669 = vsyncpa [#allocation4], 1
    %670 = vsyncpa [#allocation7], 1
    %671 = vsyncpa [#allocation5], 1

</llo_original>
